<compile_context>
chip_gen: v6e
topology: v6e:2x2x1
jax: 0.10.0
libtpu: 0.0.40
codegen_flags: <defaults>
</compile_context>

<pallas_src>
import functools

import jax
import jax.numpy as jnp
from jax.experimental import pallas as pl
from jax.experimental.pallas import tpu as pltpu


# ---------------------------------------------------------------------------
# Stateless per-element hash (murmur3 finalizer) in pure int32 ops.
# ---------------------------------------------------------------------------
def _to_signed32(v):
    v &= 0xFFFFFFFF
    return v - 0x100000000 if v >= 0x80000000 else v


_MUR1 = _to_signed32(0x85EBCA6B)
_MUR2 = _to_signed32(0xC2B2AE35)


def _lsr32(h, k):
    # Logical right shift on int32: arithmetic shift + mask off sign-extended bits.
    return jnp.bitwise_and(jnp.right_shift(h, k), jnp.int32((1 << (32 - k)) - 1))


def _uniform_bits24(idx, seed):
    """idx: int32 array of unique element ids -> uniform ints in [0, 2^24)."""
    salt = _to_signed32(seed * 0x9E3779B9 + 0x7F4A7C15)
    h = idx ^ jnp.int32(salt)
    h = h ^ _lsr32(h, 16)
    h = h * jnp.int32(_MUR1)
    h = h ^ _lsr32(h, 13)
    h = h * jnp.int32(_MUR2)
    h = h ^ _lsr32(h, 16)
    return jnp.bitwise_and(h, jnp.int32(0x00FFFFFF))


# ---------------------------------------------------------------------------
# Pass 1: per-channel batch statistics -> fused affine coefficients (a, b).
# ---------------------------------------------------------------------------
def _stats_kernel(x_ref, gamma_ref, beta_ref, ab_ref, acc_sum, acc_ssq, *,
                  eps, inv_m, keep_scale):
    i = pl.program_id(0)
    j = pl.program_id(1)

    @pl.when(jnp.logical_and(i == 0, j == 0))
    def _init():
        acc_sum[...] = jnp.zeros_like(acc_sum)
        acc_ssq[...] = jnp.zeros_like(acc_ssq)

    x = x_ref[...]                          # (bn, C, bhw) f32
    # Bulk reduction over the batch-tile axis: plain VPU adds into per-lane
    # per-channel accumulators (no XLU on the hot path).
    acc_sum[...] += jnp.sum(x, axis=0)      # (C, bhw)
    acc_ssq[...] += jnp.sum(x * x, axis=0)  # (C, bhw)

    last = jnp.logical_and(i == pl.num_programs(0) - 1,
                           j == pl.num_programs(1) - 1)

    @pl.when(last)
    def _finalize():
        c = gamma_ref.shape[0]
        # Single small cross-lane (XLU) reduction at the very end.
        total_sum = jnp.sum(acc_sum[...], axis=1, keepdims=True)    # (C, 1)
        total_ssq = jnp.sum(acc_ssq[...], axis=1, keepdims=True)    # (C, 1)
        mean = total_sum * jnp.float32(inv_m)
        var = total_ssq * jnp.float32(inv_m) - mean * mean          # biased var (torch BN)
        inv_std = jax.lax.rsqrt(var + jnp.float32(eps))
        g = gamma_ref[...]                                          # (C, 1)
        bta = beta_ref[...]                                         # (C, 1)
        # Fold the dropout 1/(1-p) scale into the per-channel affine.
        a = g * inv_std * jnp.float32(keep_scale)
        b = (bta - g * mean * inv_std) * jnp.float32(keep_scale)
        ab_ref[0:c, :] = a
        ab_ref[c:2 * c, :] = b


# ---------------------------------------------------------------------------
# Pass 2: y = x * a + b, dropout mask, store (lane-dense (N*C, H*W) layout).
# ---------------------------------------------------------------------------
def _apply_kernel(x_ref, a_ref, b_ref, o_ref, *, p, seed, hw_total):
    x = x_ref[...]                           # (brow, bhw)
    y = x * a_ref[...] + b_ref[...]          # per-row affine, scale already folded in

    if 0.0 < p < 1.0:
        i = pl.program_id(0)
        j = pl.program_id(1)
        brow, bhw = x_ref.shape
        row = jax.lax.broadcasted_iota(jnp.int32, (brow, bhw), 0) + i * brow
        col = jax.lax.broadcasted_iota(jnp.int32, (brow, bhw), 1) + j * bhw
        gidx = row * hw_total + col          # unique global element id per tile elem
        r = _uniform_bits24(gidx, seed)
        thresh = min(max(int(round(p * float(1 << 24))), 0), 1 << 24)
        keep = r >= jnp.int32(thresh)        # P(keep) = 1 - p
        y = jnp.where(keep, y, jnp.float32(0.0))

    o_ref[...] = y.astype(o_ref.dtype)


# ---------------------------------------------------------------------------
# Tiling helpers (divisor tiles only -> no ragged blocks, layout-legal shapes).
# ---------------------------------------------------------------------------
def _largest_divisor_leq(total, cap):
    for d in range(min(total, cap), 0, -1):
        if total % d == 0:
            return d
    return 1


def _pick_aligned_tile(total, cap, align):
    """Largest divisor of `total` that is <= cap and a multiple of `align`;
    falls back to the full extent (always layout-legal)."""
    if total <= cap:
        return total
    d = (cap // align) * align
    while d >= align:
        if total % d == 0:
            return d
        d -= align
    return total


# ---------------------------------------------------------------------------
# Wrapper
# ---------------------------------------------------------------------------
@functools.partial(jax.jit, static_argnames=("p", "eps", "seed"))
def ic_layer_forward(x_nchw, gamma, beta, *, p=0.5, eps=1e-5, seed=0):
    """Training-mode forward of IC_layer (BatchNorm2d + Dropout). x: (N,C,H,W) f32."""
    n, c, h, w = x_nchw.shape
    hw = h * w
    m = n * hw

    if p >= 1.0:
        keep_scale = 0.0                      # dropout(p>=1) zeroes everything
    else:
        keep_scale = 1.0 / (1.0 - p)

    x_f32 = x_nchw.astype(jnp.float32)
    x3 = x_f32.reshape(n, c, hw)              # free reshape (no transpose)
    x2 = x_f32.reshape(n * c, hw)             # free reshape (no transpose)
    gamma2 = gamma.reshape(c, 1).astype(jnp.float32)
    beta2 = beta.reshape(c, 1).astype(jnp.float32)

    # Tile sizes: lane dim a multiple of 128 (or full), modest VMEM footprint
    # (~2 MiB blocks before double-buffering).
    bhw = _pick_aligned_tile(hw, 2048, 128)
    bn = _largest_divisor_leq(n, max(1, (2 * 1024 * 1024) // max(1, c * bhw * 4)))
    row_cap = max(8, ((2 * 1024 * 1024) // (bhw * 4)) // 8 * 8)
    brow = _pick_aligned_tile(n * c, row_cap, 8)

    cparams_stats = pltpu.CompilerParams(
        dimension_semantics=("arbitrary", "arbitrary"),
        vmem_limit_bytes=32 * 1024 * 1024)
    cparams_apply = pltpu.CompilerParams(
        dimension_semantics=("parallel", "parallel"),
        vmem_limit_bytes=32 * 1024 * 1024)

    # ---- pass 1: per-channel affine coefficients (a, b) ----
    ab = pl.pallas_call(
        functools.partial(_stats_kernel, eps=float(eps), inv_m=1.0 / float(m),
                          keep_scale=float(keep_scale)),
        out_shape=jax.ShapeDtypeStruct((2 * c, 1), jnp.float32),
        grid=(n // bn, hw // bhw),
        in_specs=[
            pl.BlockSpec((bn, c, bhw), lambda i, j: (i, 0, j)),
            pl.BlockSpec((c, 1), lambda i, j: (0, 0)),
            pl.BlockSpec((c, 1), lambda i, j: (0, 0)),
        ],
        out_specs=pl.BlockSpec((2 * c, 1), lambda i, j: (0, 0)),
        scratch_shapes=[pltpu.VMEM((c, bhw), jnp.float32),
                        pltpu.VMEM((c, bhw), jnp.float32)],
        compiler_params=cparams_stats,
    )(x3, gamma2, beta2)

    # Broadcast the C coefficients to one scalar per (n, c) row (tiny op).
    a_row = jnp.tile(ab[:c, 0], n).reshape(n * c, 1)
    b_row = jnp.tile(ab[c:, 0], n).reshape(n * c, 1)

    # ---- pass 2: normalize + dropout + store ----
    out2 = pl.pallas_call(
        functools.partial(_apply_kernel, p=float(p), seed=int(seed), hw_total=hw),
        out_shape=jax.ShapeDtypeStruct((n * c, hw), jnp.float32),
        grid=((n * c) // brow, hw // bhw),
        in_specs=[
            pl.BlockSpec((brow, bhw), lambda i, j: (i, j)),
            pl.BlockSpec((brow, 1), lambda i, j: (i, 0)),
            pl.BlockSpec((brow, 1), lambda i, j: (i, 0)),
        ],
        out_specs=pl.BlockSpec((brow, bhw), lambda i, j: (i, j)),
        compiler_params=cparams_apply,
    )(x2, a_row, b_row)

    return out2.reshape(n, c, h, w)


if __name__ == "__main__":
    # Small shapes consistent with the module: N=2, planes(C)=4, H=W=16.
    key = jax.random.PRNGKey(0)
    x = jax.random.normal(key, (2, 4, 16, 16), dtype=jnp.float32)

    planes = 4
    # PyTorch BatchNorm2d default init: weight = 1, bias = 0.
    gamma = jnp.ones((planes,), dtype=jnp.float32)
    beta = jnp.zeros((planes,), dtype=jnp.float32)

    # Sanity check of the BatchNorm path (dropout disabled -> deterministic).
    out_p0 = ic_layer_forward(x, gamma, beta, p=0.0, eps=1e-5, seed=0)
    jax.block_until_ready(out_p0)
    mean = jnp.mean(x, axis=(0, 2, 3), keepdims=True)
    var = jnp.mean((x - mean) ** 2, axis=(0, 2, 3), keepdims=True)
    ref = (x - mean) / jnp.sqrt(var + 1e-5)
    assert out_p0.shape == x.shape and out_p0.dtype == jnp.float32
    assert float(jnp.max(jnp.abs(out_p0 - ref))) < 1e-3

    # The module's actual configuration: p = 0.5 dropout (training mode).
    out = ic_layer_forward(x, gamma, beta, p=0.5, eps=1e-5, seed=0)
    jax.block_until_ready(out)
    assert out.shape == x.shape and out.dtype == jnp.float32
    assert bool(jnp.all(jnp.isfinite(out)))
    print("KERNEL_OK")
</pallas_src>

<mosaic_0001>
module attributes {stable_mosaic.version = 11 : i64} {
  func.func @_stats_kernel(%arg0: i32, %arg1: i32, %arg2: memref<2x4x256xf32, #tpu.memory_space<vmem>>, %arg3: memref<4x1xf32, #tpu.memory_space<vmem>>, %arg4: memref<4x1xf32, #tpu.memory_space<vmem>>, %arg5: memref<8x1xf32, #tpu.memory_space<vmem>>, %arg6: memref<4x256xf32, #tpu.memory_space<vmem>>, %arg7: memref<4x256xf32, #tpu.memory_space<vmem>>) attributes {dimension_semantics = [#tpu.dimension_semantics<arbitrary>, #tpu.dimension_semantics<arbitrary>], iteration_bounds = array<i64: 1, 1>, scalar_prefetch = 0 : i64, scratch_operands = 2 : i64, tpu.core_type = #tpu.core_type<tc>, window_params = [{transform_indices = @transform_0, window_bounds = array<i64: 2, 4, 256>}, {pipeline_mode = #tpu.pipeline_mode<synchronous>, transform_indices = @transform_1, window_bounds = array<i64: 4, 1>}, {pipeline_mode = #tpu.pipeline_mode<synchronous>, transform_indices = @transform_2, window_bounds = array<i64: 4, 1>}, {pipeline_mode = #tpu.pipeline_mode<synchronous>, transform_indices = @transform_3, window_bounds = array<i64: 8, 1>}]} {
    %c0_i32 = arith.constant 0 : i32
    %0 = arith.cmpi eq, %arg0, %c0_i32 : i32
    %c0_i32_0 = arith.constant 0 : i32
    %1 = arith.cmpi eq, %arg1, %c0_i32_0 : i32
    %2 = arith.andi %0, %1 : i1
    %3 = arith.extui %2 : i1 to i32
    %c0_i32_1 = arith.constant 0 : i32
    %4 = arith.cmpi ne, %3, %c0_i32_1 : i32
    scf.if %4 {
      %cst_16 = arith.constant 0.000000e+00 : f32
      %20 = vector.broadcast %cst_16 : f32 to vector<4x256xf32>
      %c0_17 = arith.constant 0 : index
      %c0_18 = arith.constant 0 : index
      %21 = vector.load %arg6[%c0_17, %c0_18] : memref<4x256xf32, #tpu.memory_space<vmem>>, vector<4x256xf32>
      tpu.vector_store %arg6[%c0_17, %c0_18], %20 {strides = array<i32>} : memref<4x256xf32, #tpu.memory_space<vmem>>, vector<4x256xf32>,
      %cst_19 = arith.constant 0.000000e+00 : f32
      %22 = vector.broadcast %cst_19 : f32 to vector<4x256xf32>
      %c0_20 = arith.constant 0 : index
      %c0_21 = arith.constant 0 : index
      %23 = vector.load %arg7[%c0_20, %c0_21] : memref<4x256xf32, #tpu.memory_space<vmem>>, vector<4x256xf32>
      tpu.vector_store %arg7[%c0_20, %c0_21], %22 {strides = array<i32>} : memref<4x256xf32, #tpu.memory_space<vmem>>, vector<4x256xf32>,
    } else {
    }
    %c0 = arith.constant 0 : index
    %c0_2 = arith.constant 0 : index
    %c0_3 = arith.constant 0 : index
    %5 = vector.load %arg2[%c0, %c0_2, %c0_3] : memref<2x4x256xf32, #tpu.memory_space<vmem>>, vector<2x4x256xf32>
    %c0_4 = arith.constant 0 : index
    %c0_5 = arith.constant 0 : index
    %6 = vector.load %arg6[%c0_4, %c0_5] : memref<4x256xf32, #tpu.memory_space<vmem>>, vector<4x256xf32>
    %cst = arith.constant dense<0.000000e+00> : vector<4x256xf32>
    %7 = vector.multi_reduction <add>, %5, %cst [0] : vector<2x4x256xf32> to vector<4x256xf32>
    %8 = arith.addf %6, %7 : vector<4x256xf32>
    %c0_6 = arith.constant 0 : index
    %c0_7 = arith.constant 0 : index
    %9 = vector.load %arg6[%c0_6, %c0_7] : memref<4x256xf32, #tpu.memory_space<vmem>>, vector<4x256xf32>
    tpu.vector_store %arg6[%c0_6, %c0_7], %8 {strides = array<i32>} : memref<4x256xf32, #tpu.memory_space<vmem>>, vector<4x256xf32>,
    %c0_8 = arith.constant 0 : index
    %c0_9 = arith.constant 0 : index
    %10 = vector.load %arg7[%c0_8, %c0_9] : memref<4x256xf32, #tpu.memory_space<vmem>>, vector<4x256xf32>
    %11 = arith.mulf %5, %5 : vector<2x4x256xf32>
    %cst_10 = arith.constant dense<0.000000e+00> : vector<4x256xf32>
    %12 = vector.multi_reduction <add>, %11, %cst_10 [0] : vector<2x4x256xf32> to vector<4x256xf32>
    %13 = arith.addf %10, %12 : vector<4x256xf32>
    %c0_11 = arith.constant 0 : index
    %c0_12 = arith.constant 0 : index
    %14 = vector.load %arg7[%c0_11, %c0_12] : memref<4x256xf32, #tpu.memory_space<vmem>>, vector<4x256xf32>
    tpu.vector_store %arg7[%c0_11, %c0_12], %13 {strides = array<i32>} : memref<4x256xf32, #tpu.memory_space<vmem>>, vector<4x256xf32>,
    %c0_i32_13 = arith.constant 0 : i32
    %15 = arith.cmpi eq, %arg0, %c0_i32_13 : i32
    %c0_i32_14 = arith.constant 0 : i32
    %16 = arith.cmpi eq, %arg1, %c0_i32_14 : i32
    %17 = arith.andi %15, %16 : i1
    %18 = arith.extui %17 : i1 to i32
    %c0_i32_15 = arith.constant 0 : i32
    %19 = arith.cmpi ne, %18, %c0_i32_15 : i32
    scf.if %19 {
      %c0_16 = arith.constant 0 : index
      %c0_17 = arith.constant 0 : index
      %20 = vector.load %arg6[%c0_16, %c0_17] : memref<4x256xf32, #tpu.memory_space<vmem>>, vector<4x256xf32>
      %cst_18 = arith.constant dense<0.000000e+00> : vector<4xf32>
      %21 = vector.multi_reduction <add>, %20, %cst_18 [1] : vector<4x256xf32> to vector<4xf32>
      %22 = vector.shape_cast %21 : vector<4xf32> to vector<4x1xf32>
      %c0_19 = arith.constant 0 : index
      %c0_20 = arith.constant 0 : index
      %23 = vector.load %arg7[%c0_19, %c0_20] : memref<4x256xf32, #tpu.memory_space<vmem>>, vector<4x256xf32>
      %cst_21 = arith.constant dense<0.000000e+00> : vector<4xf32>
      %24 = vector.multi_reduction <add>, %23, %cst_21 [1] : vector<4x256xf32> to vector<4xf32>
      %25 = vector.shape_cast %24 : vector<4xf32> to vector<4x1xf32>
      %cst_22 = arith.constant 0.001953125 : f32
      %26 = vector.broadcast %cst_22 : f32 to vector<4x1xf32>
      %27 = arith.mulf %22, %26 : vector<4x1xf32>
      %cst_23 = arith.constant 0.001953125 : f32
      %28 = vector.broadcast %cst_23 : f32 to vector<4x1xf32>
      %29 = arith.mulf %25, %28 : vector<4x1xf32>
      %30 = arith.mulf %27, %27 : vector<4x1xf32>
      %31 = arith.subf %29, %30 : vector<4x1xf32>
      %cst_24 = arith.constant 9.99999974E-6 : f32
      %32 = vector.broadcast %cst_24 : f32 to vector<4x1xf32>
      %33 = arith.addf %31, %32 : vector<4x1xf32>
      %34 = math.rsqrt %33 : vector<4x1xf32>
      %c0_25 = arith.constant 0 : index
      %c0_26 = arith.constant 0 : index
      %35 = vector.load %arg3[%c0_25, %c0_26] : memref<4x1xf32, #tpu.memory_space<vmem>>, vector<4x1xf32>
      %c0_27 = arith.constant 0 : index
      %c0_28 = arith.constant 0 : index
      %36 = vector.load %arg4[%c0_27, %c0_28] : memref<4x1xf32, #tpu.memory_space<vmem>>, vector<4x1xf32>
      %37 = arith.mulf %35, %34 : vector<4x1xf32>
      %cst_29 = arith.constant 1.000000e+00 : f32
      %38 = vector.broadcast %cst_29 : f32 to vector<4x1xf32>
      %39 = arith.mulf %37, %38 : vector<4x1xf32>
      %40 = arith.mulf %35, %27 : vector<4x1xf32>
      %41 = arith.mulf %40, %34 : vector<4x1xf32>
      %42 = arith.subf %36, %41 : vector<4x1xf32>
      %cst_30 = arith.constant 1.000000e+00 : f32
      %43 = vector.broadcast %cst_30 : f32 to vector<4x1xf32>
      %44 = arith.mulf %42, %43 : vector<4x1xf32>
      %c0_31 = arith.constant 0 : index
      %c0_32 = arith.constant 0 : index
      %45 = vector.load %arg5[%c0_31, %c0_32] : memref<8x1xf32, #tpu.memory_space<vmem>>, vector<4x1xf32>
      tpu.vector_store %arg5[%c0_31, %c0_32], %39 {strides = array<i32>} : memref<8x1xf32, #tpu.memory_space<vmem>>, vector<4x1xf32>,
      %c4 = arith.constant 4 : index
      %c0_33 = arith.constant 0 : index
      %46 = vector.load %arg5[%c4, %c0_33] : memref<8x1xf32, #tpu.memory_space<vmem>>, vector<4x1xf32>
      tpu.vector_store %arg5[%c4, %c0_33], %44 {strides = array<i32>} : memref<8x1xf32, #tpu.memory_space<vmem>>, vector<4x1xf32>,
    } else {
    }
    return
  }
  func.func @transform_0(%arg0: i32, %arg1: i32) -> (i32, i32, i32) {
    %c0_i32 = arith.constant 0 : i32
    %c0_i32_0 = arith.constant 0 : i32
    return %arg0, %c0_i32, %arg1 : i32, i32, i32
  }
  func.func @transform_1(%arg0: i32, %arg1: i32) -> (i32, i32) {
    %c0_i32 = arith.constant 0 : i32
    %c0_i32_0 = arith.constant 0 : i32
    %c0_i32_1 = arith.constant 0 : i32
    return %c0_i32, %c0_i32_0 : i32, i32
  }
  func.func @transform_2(%arg0: i32, %arg1: i32) -> (i32, i32) {
    %c0_i32 = arith.constant 0 : i32
    %c0_i32_0 = arith.constant 0 : i32
    %c0_i32_1 = arith.constant 0 : i32
    return %c0_i32, %c0_i32_0 : i32, i32
  }
  func.func @transform_3(%arg0: i32, %arg1: i32) -> (i32, i32) {
    %c0_i32 = arith.constant 0 : i32
    %c0_i32_0 = arith.constant 0 : i32
    %c0_i32_1 = arith.constant 0 : i32
    return %c0_i32, %c0_i32_0 : i32, i32
  }
}

module attributes {stable_mosaic.version = 11 : i64} {
  func.func @_apply_kernel(%arg0: i32, %arg1: i32, %arg2: memref<8x256xf32, #tpu.memory_space<vmem>>, %arg3: memref<8x1xf32, #tpu.memory_space<vmem>>, %arg4: memref<8x1xf32, #tpu.memory_space<vmem>>, %arg5: memref<8x256xf32, #tpu.memory_space<vmem>>) attributes {dimension_semantics = [#tpu.dimension_semantics<parallel>, #tpu.dimension_semantics<parallel>], iteration_bounds = array<i64: 1, 1>, scalar_prefetch = 0 : i64, scratch_operands = 0 : i64, tpu.core_type = #tpu.core_type<tc>, window_params = [{transform_indices = @transform_0, window_bounds = array<i64: 8, 256>}, {transform_indices = @transform_1, window_bounds = array<i64: 8, 1>}, {transform_indices = @transform_2, window_bounds = array<i64: 8, 1>}, {transform_indices = @transform_3, window_bounds = array<i64: 8, 256>}]} {
    %c0 = arith.constant 0 : index
    %c0_0 = arith.constant 0 : index
    %0 = vector.load %arg2[%c0, %c0_0] : memref<8x256xf32, #tpu.memory_space<vmem>>, vector<8x256xf32>
    %c0_1 = arith.constant 0 : index
    %c0_2 = arith.constant 0 : index
    %1 = vector.load %arg3[%c0_1, %c0_2] : memref<8x1xf32, #tpu.memory_space<vmem>>, vector<8x1xf32>
    %2 = vector.broadcast %1 : vector<8x1xf32> to vector<8x256xf32>
    %3 = arith.mulf %0, %2 : vector<8x256xf32>
    %c0_3 = arith.constant 0 : index
    %c0_4 = arith.constant 0 : index
    %4 = vector.load %arg4[%c0_3, %c0_4] : memref<8x1xf32, #tpu.memory_space<vmem>>, vector<8x1xf32>
    %5 = vector.broadcast %4 : vector<8x1xf32> to vector<8x256xf32>
    %6 = arith.addf %3, %5 : vector<8x256xf32>
    %c0_5 = arith.constant 0 : index
    %c0_6 = arith.constant 0 : index
    %7 = vector.load %arg5[%c0_5, %c0_6] : memref<8x256xf32, #tpu.memory_space<vmem>>, vector<8x256xf32>
    tpu.vector_store %arg5[%c0_5, %c0_6], %6 {strides = array<i32>} : memref<8x256xf32, #tpu.memory_space<vmem>>, vector<8x256xf32>,
    return
  }
  func.func @transform_0(%arg0: i32, %arg1: i32) -> (i32, i32) {
    %c0_i32 = arith.constant 0 : i32
    return %arg0, %arg1 : i32, i32
  }
  func.func @transform_1(%arg0: i32, %arg1: i32) -> (i32, i32) {
    %c0_i32 = arith.constant 0 : i32
    %c0_i32_0 = arith.constant 0 : i32
    return %arg0, %c0_i32 : i32, i32
  }
  func.func @transform_2(%arg0: i32, %arg1: i32) -> (i32, i32) {
    %c0_i32 = arith.constant 0 : i32
    %c0_i32_0 = arith.constant 0 : i32
    return %arg0, %c0_i32 : i32, i32
  }
  func.func @transform_3(%arg0: i32, %arg1: i32) -> (i32, i32) {
    %c0_i32 = arith.constant 0 : i32
    return %arg0, %arg1 : i32, i32
  }
}

</mosaic_0001>

<llo_original>
// kernel: tile.0
$region0: #{tile.0}
  %s0 = inlined_call_operand.vmem [shape: f32[2,4], index: 0, kind: input, shape index: {}]
  %s1 = inlined_call_operand.vmem [shape: f32[8,1], index: 1, kind: output, shape index: {}]
  $region1: #{tile.0} parent=0
    #allocation0 [shape = 'u8[4096]{0}', space=vmem, size = 0x1000, scoped, tag = 'scoped mem for input reshape']
    %s3 = sshll.u32 1, 2
    %s4 = ssub.s32 %s3, 1
    %v5 = vld [vmem:[%s0] sm:%s4]
    %6 = vst [vmem:[#allocation0] sm:%s4] %v5
    %v7 = vld [vmem:[#allocation0] sm:$0x3]
    %vm8 = vcmask 7168
    %9 = vst.msk [vmem:[%s1] ss:$4 sm:$0x3] %vm8, %v7
    %v10 = vld [vmem:[#allocation0] sm:$0x3]
    %11 = vrot.lane.b32.xlu0 %v10, 127
    %v12 = vpop.permute.xlu0 %11
    %vm13 = vcmask 7168
    %s14 = scalar_lea.vmem %s1, 1
    %15 = vst.msk [vmem:[%s14] ss:$4 sm:$0x3] %vm13, %v12
    %v16 = vld [vmem:[#allocation0] sm:$0x3]
    %17 = vrot.lane.b32.xlu0 %v16, 126
    %v18 = vpop.permute.xlu0 %17
    %vm19 = vcmask 7168
    %s20 = scalar_lea.vmem %s1, 2
    %21 = vst.msk [vmem:[%s20] ss:$4 sm:$0x3] %vm19, %v18
    %v22 = vld [vmem:[#allocation0] sm:$0x3]
    %23 = vrot.lane.b32.xlu0 %v22, 125
    %v24 = vpop.permute.xlu0 %23
    %vm25 = vcmask 7168
    %s26 = scalar_lea.vmem %s1, 3
    %27 = vst.msk [vmem:[%s26] ss:$4 sm:$0x3] %vm25, %v24

// kernel: tile.14
$region0: #{tile.14}
  #allocation0 [shape = 's32[1]{0}', space=sflag, size = 0x4, scoped, tag = 'scoped memory for tile.14']
  %s0 = inlined_call_operand.vmem [shape: f32[4], index: 0, kind: input, shape index: {}]
  %s1 = inlined_call_operand.vmem [shape: f32[2,4], index: 1, kind: output, shape index: {}]
  // Predicated region
  $region2: #{tile.14} parent=0 // pred_check
    _
  $region3: #{tile.14} parent=0 // pred_check_branch
    %3 = sbr.rel (0) target = $region5
  $region4: #{tile.14} parent=0 // pred_region
    _
  $region5: #{tile.14} parent=0 // pred_fallthru
    _
  %v4 = vld [vmem:[%s0] ss:$0 sm:$0xff]
  %5 = vst [vmem:[%s1] sm:$0x3] %v4

// kernel: ic_layer_forward.2
$region0: #{ic_layer_forward.2}
  #allocation0 [shape = 'u32[]', space=smem, size = 0x4, offset = 0x4, fixed_abs, tag = 'smem constant byte address 0x4 - core index']
  #allocation1 [shape = 'u32[144,128]{1,0:T(1,128)}', space=vmem, size = 0x12000, scoped, tag = 'internal scratch']
  #allocation2 [shape = 'f32[4,256]{1,0:T(4,128)}', space=vmem, size = 0x1000, scoped, tag = 'scratch operand']
  #allocation3 [shape = 'f32[4,256]{1,0:T(4,128)}', space=vmem, size = 0x1000, scoped, tag = 'scratch operand']
  %s0 = inlined_call_operand.vmem [shape: f32[2,4,256], index: 0, kind: input, shape index: {}]
  %s1 = inlined_call_operand.vmem [shape: f32[4,1], index: 1, kind: input, shape index: {}]
  %s2 = inlined_call_operand.vmem [shape: f32[4,1], index: 2, kind: input, shape index: {}]
  %s3 = inlined_call_operand.vmem [shape: f32[8,1], index: 3, kind: output, shape index: {}]
  %s4 = sld [smem:[#allocation0]]
  $region30: #{ic_layer_forward.2} parent=0
    _
  %s6 = ssub.s32 1, %s4
  %s7 = scalar_select 0, %s6, %s4
  // Predicated region
  $region2: #{ic_layer_forward.2} parent=0 // pred_check
    _
  $region3: #{ic_layer_forward.2} parent=0 // pred_check_branch
    %9 = sbr.rel (0) target = $region5
  $region4: #{ic_layer_forward.2} parent=0 // pred_region
    _
  $region5: #{ic_layer_forward.2} parent=0 // pred_fallthru
    _
  // Predicated region
  $region6: #{ic_layer_forward.2} parent=0 // pred_check
    _
  $region7: #{ic_layer_forward.2} parent=0 // pred_check_branch
    %11 = sbr.rel (0) target = $region9
  $region8: #{ic_layer_forward.2} parent=0 // pred_region
    _
  $region9: #{ic_layer_forward.2} parent=0 // pred_fallthru
    _
  // Predicated region
  $region10: #{ic_layer_forward.2} parent=0 // pred_check
    _
  $region11: #{ic_layer_forward.2} parent=0 // pred_check_branch
    %13 = sbr.rel (0) target = $region13
  $region12: #{ic_layer_forward.2} parent=0 // pred_region
    _
  $region13: #{ic_layer_forward.2} parent=0 // pred_fallthru
    _
  %p14 = scmp.eq.s32.totalorder 0, 0
  %p15 = scmp.eq.s32.totalorder 0, 0
  %p16 = pnand %p14, %p15
  %p17 = pneg %p16
  // Predicated region
  $region14: #{ic_layer_forward.2} parent=0 // pred_check
    _
  $region15: #{ic_layer_forward.2} parent=0 // pred_check_branch
    %19 = sbr.rel (%p16) target = $region17
  $region16: #{ic_layer_forward.2} parent=0 // pred_region
    %20 = vst [vmem:[#allocation2] sm:$0xff] 0.0
    %21 = vst [vmem:[#allocation3] sm:$0xff] 0.0
  $region17: #{ic_layer_forward.2} parent=0 // pred_fallthru
    _
  %v22 = vld [vmem:[%s0] sm:$0xff]
  %v23 = vld [vmem:[%s0 + $0x8] sm:$0xff]
  %v24 = vld [vmem:[#allocation2] sm:$0xff]
  %v27 = vcombine.high %v22, %v22
  %v28 = vcombine.high %v23, %v23
  %vm31 = vcmask 1043456
  %v32 = vsel %vm31, %v22, 0.0
  %v33 = vsel %vm31, %v23, 0.0
  %v34 = vadd.f32 %v32, %v33
  %v35 = vsel %vm31, %v27, 0.0
  %v36 = vsel %vm31, %v28, 0.0
  %v37 = vadd.f32 %v35, %v36
  %v40 = vcombine.low %v34, %v37
  %v42 = vadd.f32 %v24, %v40
  %43 = vst [vmem:[#allocation2] sm:$0xff] %v42
  %v44 = vld [vmem:[#allocation3] sm:$0xff]
  %v45 = vmul.f32 %v22, %v22
  %v46 = vmul.f32 %v23, %v23
  %v49 = vcombine.high %v45, %v45
  %v50 = vcombine.high %v46, %v46
  %v53 = vsel %vm31, %v45, 0.0
  %v54 = vsel %vm31, %v46, 0.0
  %v55 = vadd.f32 %v53, %v54
  %v56 = vsel %vm31, %v49, 0.0
  %v57 = vsel %vm31, %v50, 0.0
  %v58 = vadd.f32 %v56, %v57
  %v61 = vcombine.low %v55, %v58
  %v63 = vadd.f32 %v44, %v61
  %64 = vst [vmem:[#allocation3] sm:$0xff] %v63
  // Predicated region
  $region18: #{ic_layer_forward.2} parent=0 // pred_check
    _
  $region19: #{ic_layer_forward.2} parent=0 // pred_check_branch
    %66 = sbr.rel (%p16) target = $region21
  $region20: #{ic_layer_forward.2} parent=0 // pred_region
    %v67 = vld [vmem:[#allocation2] sm:$0xff]
    %v69 = vcombine.high %v67, %v67
    %v71 = vsel %vm31, %v67, 0.0
    %v72 = vsel %vm31, %v69, 0.0
    %v73 = vadd.f32 %v71, %v72
    %74 = vadd.xlane.f32.xlu0 %v73
    %v75 = vpop.xlane.xlu0 %74
    %v76 = vld [vmem:[#allocation3] sm:$0xff]
    %v78 = vcombine.high %v76, %v76
    %v80 = vsel %vm31, %v76, 0.0
    %v81 = vsel %vm31, %v78, 0.0
    %v82 = vadd.f32 %v80, %v81
    %83 = vadd.xlane.f32.xlu0 %v82
    %v84 = vpop.xlane.xlu0 %83
    %v85 = vmul.f32 %v75, 0.001953125
    %v86 = vmul.f32 %v84, 0.001953125
    %v87 = vmul.f32 %v85, %v85
    %v88 = vsub.f32 %v86, %v87
    %v89 = vadd.f32 %v88, 1e-05
    %v90 = vrsqrt.pop %v89
    %v91 = vld [vmem:[%s1] sm:$0xf]
    %v92 = vld [vmem:[%s2] sm:$0xf]
    %v93 = vmul.f32 %v91, %v90
    %v94 = vmul.f32 %v91, %v85
    %v95 = vmul.f32 %v94, %v90
    %v96 = vsub.f32 %v92, %v95
    %vm97 = vcmask 3072
    %98 = vst.msk [vmem:[%s3] sm:$0xf] %vm97, %v93
    %99 = vst.msk [vmem:[%s3 + $0x4] sm:$0xf] %vm97, %v96
  $region21: #{ic_layer_forward.2} parent=0 // pred_fallthru
    _
  // Predicated region
  $region22: #{ic_layer_forward.2} parent=0 // pred_check
    _
  $region23: #{ic_layer_forward.2} parent=0 // pred_check_branch
    %101 = sbr.rel (0) target = $region25
  $region24: #{ic_layer_forward.2} parent=0 // pred_region
    _
  $region25: #{ic_layer_forward.2} parent=0 // pred_fallthru
    _
  // Predicated region
  $region26: #{ic_layer_forward.2} parent=0 // pred_check
    _
  $region27: #{ic_layer_forward.2} parent=0 // pred_check_branch
    %103 = sbr.rel (0) target = $region29
  $region28: #{ic_layer_forward.2} parent=0 // pred_region
    _
  $region29: #{ic_layer_forward.2} parent=0 // pred_fallthru
    _

// kernel: ic_layer_forward.3
$region0: #{ic_layer_forward.3}
  #allocation0 [shape = 'u32[]', space=smem, size = 0x4, offset = 0x4, fixed_abs, tag = 'smem constant byte address 0x4 - core index']
  #allocation1 [shape = 'u32[144,128]{1,0:T(1,128)}', space=vmem, size = 0x12000, scoped, tag = 'internal scratch']
  %s0 = inlined_call_operand.vmem [shape: f32[8,256], index: 0, kind: input, shape index: {}]
  %s1 = inlined_call_operand.vmem [shape: f32[8,1], index: 1, kind: input, shape index: {}]
  %s2 = inlined_call_operand.vmem [shape: f32[8,1], index: 2, kind: input, shape index: {}]
  %s3 = inlined_call_operand.vmem [shape: f32[8,256], index: 3, kind: output, shape index: {}]
  %s4 = sld [smem:[#allocation0]]
  $region22: #{ic_layer_forward.3} parent=0
    _
  %s6 = ssub.s32 1, %s4
  %s7 = scalar_select 0, %s6, %s4
  // Predicated region
  $region2: #{ic_layer_forward.3} parent=0 // pred_check
    _
  $region3: #{ic_layer_forward.3} parent=0 // pred_check_branch
    %9 = sbr.rel (0) target = $region5
  $region4: #{ic_layer_forward.3} parent=0 // pred_region
    _
  $region5: #{ic_layer_forward.3} parent=0 // pred_fallthru
    _
  // Predicated region
  $region6: #{ic_layer_forward.3} parent=0 // pred_check
    _
  $region7: #{ic_layer_forward.3} parent=0 // pred_check_branch
    %11 = sbr.rel (0) target = $region9
  $region8: #{ic_layer_forward.3} parent=0 // pred_region
    _
  $region9: #{ic_layer_forward.3} parent=0 // pred_fallthru
    _
  // Predicated region
  $region10: #{ic_layer_forward.3} parent=0 // pred_check
    _
  $region11: #{ic_layer_forward.3} parent=0 // pred_check_branch
    %13 = sbr.rel (0) target = $region13
  $region12: #{ic_layer_forward.3} parent=0 // pred_region
    _
  $region13: #{ic_layer_forward.3} parent=0 // pred_fallthru
    _
  %v14 = vld [vmem:[%s0] sm:$0xff]
  %v15 = vld [vmem:[%s0 + $0x8] sm:$0xff]
  %v16 = vld [vmem:[%s1] sm:$0xff]
  %18 = vset.pattern.permute.xlu0 0
  %19 = vperm.xlu0 %18, %v16
  %v20 = vpop.permute.xlu0 %19
  %v22 = vmul.f32 %v14, %v20
  %v23 = vmul.f32 %v15, %v20
  %v24 = vld [vmem:[%s2] sm:$0xff]
  %26 = vset.pattern.permute.xlu0 0
  %27 = vperm.xlu0 %26, %v24
  %v28 = vpop.permute.xlu0 %27
  %v30 = vadd.f32 %v22, %v28
  %v31 = vadd.f32 %v23, %v28
  %32 = vst [vmem:[%s3] sm:$0xff] %v30
  %33 = vst [vmem:[%s3 + $0x8] sm:$0xff] %v31
  // Predicated region
  $region14: #{ic_layer_forward.3} parent=0 // pred_check
    _
  $region15: #{ic_layer_forward.3} parent=0 // pred_check_branch
    %35 = sbr.rel (0) target = $region17
  $region16: #{ic_layer_forward.3} parent=0 // pred_region
    _
  $region17: #{ic_layer_forward.3} parent=0 // pred_fallthru
    _
  // Predicated region
  $region18: #{ic_layer_forward.3} parent=0 // pred_check
    _
  $region19: #{ic_layer_forward.3} parent=0 // pred_check_branch
    %37 = sbr.rel (0) target = $region21
  $region20: #{ic_layer_forward.3} parent=0 // pred_region
    _
  $region21: #{ic_layer_forward.3} parent=0 // pred_fallthru
    _

</llo_original>
